<compile_context>
chip_gen: v6e
topology: v6e:2x2x1
jax: 0.10.0
libtpu: 0.0.40
codegen_flags: <defaults>
</compile_context>

<pallas_src>
from functools import partial

import jax
import jax.numpy as jnp
from jax.experimental import pallas as pl
from jax.experimental.pallas import tpu as pltpu

EPS = 1e-5  # BatchNorm3d default eps


def _round_up(x, m):
    return ((x + m - 1) // m) * m


# ---------------------------------------------------------------------------
# Fused Pallas kernel: whole forward pass for one tile of R = N*H columns.
# ---------------------------------------------------------------------------
def _fused_kernel(x_ref, w1_ref, w2_ref, wl_ref, o_ref):
    # x:  (K1, TR)  bf16 streaming activations; row k1 is the constant-one bias row.
    # w1: (K2, K1)  bf16 banded conv1 weight (BN scale + shift folded; bias trick).
    # w2: (K3, K2)  bf16 banded conv2 weight (permute + BN folded; bias trick).
    # wl: (CP, K3)  bf16 mean-over-T + Linear (+ bias) fused.
    # o:  (CP, TR)  f32 result.
    h1 = jnp.dot(w1_ref[...], x_ref[...], preferred_element_type=jnp.float32)
    h1 = jnp.maximum(h1, 0.0).astype(jnp.bfloat16)        # ReLU in f32, stream bf16
    h2 = jnp.dot(w2_ref[...], h1, preferred_element_type=jnp.float32)
    h2 = jnp.maximum(h2, 0.0).astype(jnp.bfloat16)
    o_ref[...] = jnp.dot(wl_ref[...], h2, preferred_element_type=jnp.float32)


def _resident_spec(block_shape):
    """Constant-index weight block: single VMEM buffer (it never changes)."""
    idx = lambda i: (0, 0)
    try:
        return pl.BlockSpec(block_shape, idx, pipeline_mode=pl.Buffered(1))
    except Exception:  # pipeline_mode / Buffered(1) unavailable -> default buffering
        return pl.BlockSpec(block_shape, idx)


def _fused_forward(xk, w1a, w2a, wla, *, tile_r, cp_rows):
    k1p, r_pad = xk.shape
    k2p = w1a.shape[0]
    k3p = w2a.shape[0]
    return pl.pallas_call(
        _fused_kernel,
        out_shape=jax.ShapeDtypeStruct((cp_rows, r_pad), jnp.float32),
        grid=(r_pad // tile_r,),
        in_specs=[
            pl.BlockSpec((k1p, tile_r), lambda i: (0, i)),   # activation stream
            _resident_spec((k2p, k1p)),                      # weights stay VMEM-resident
            _resident_spec((k3p, k2p)),
            _resident_spec((cp_rows, k3p)),
        ],
        out_specs=pl.BlockSpec((cp_rows, tile_r), lambda i: (0, i)),
        compiler_params=pltpu.CompilerParams(
            dimension_semantics=("parallel",),
            vmem_limit_bytes=48 * 1024 * 1024),              # > v5e 16 MiB default, < v7x 64 MiB
    )(xk, w1a, w2a, wla)


# ---------------------------------------------------------------------------
# Parameter folding: conv(3,1,1)+pad -> banded matmul, BN -> scale folded into
# weights, permute -> column re-ordering, mean+Linear -> one matrix, biases ->
# extra constant-one row (bias trick), dims padded to MXU-friendly multiples.
# ---------------------------------------------------------------------------
def _build_fused_weights(params, depth, width):
    # Stage 1 (PositionTransformer)
    w1 = params['w1'][:, :, :, 0, 0]                      # (P, C_in, 3)
    p_out, c_in = w1.shape[0], w1.shape[1]
    scale1 = params['g1'] / jnp.sqrt(params['rv1'] + EPS)
    w1e = w1 * scale1[:, None, None]
    s1 = (params['b1'] - params['rm1']) * scale1 + params['be1']

    # Stage 2 (TemporalTransformer) -- after permute its channel dim is D.
    w2 = params['w2'][:, :, :, 0, 0]                      # (T, D, 3)
    t_out = w2.shape[0]
    scale2 = params['g2'] / jnp.sqrt(params['rv2'] + EPS)
    w2e = w2 * scale2[:, None, None]
    s2 = (params['b2'] - params['rm2']) * scale2 + params['be2']

    wl, bl = params['wl'], params['bl']                   # (Cc, W), (Cc,)
    n_cls = wl.shape[0]

    # Banded matrices: zero-padded depth-3 conv == matmul over (chan, depth) rows.
    shift_d = jnp.stack([jnp.eye(depth, k=kd - 1, dtype=jnp.float32)
                         for kd in range(3)], axis=-1)    # [d, d', kd]
    w1_big = jnp.einsum('ock,dek->odce', w1e, shift_d).reshape(
        p_out * depth, c_in * depth)                      # rows (o,d), cols (c,d')
    shift_p = jnp.stack([jnp.eye(p_out, k=kd - 1, dtype=jnp.float32)
                         for kd in range(3)], axis=-1)    # [p, p', kd]
    # permute(0,2,1,3,4) is absorbed by reading h1 rows as (p', d).
    w2_big = jnp.einsum('tdk,pqk->tpqd', w2e, shift_p).reshape(
        t_out * p_out, p_out * depth)                     # rows (t,p), cols (p',d)

    # mean(dim=1) over T + Linear over the width axis.
    wl4 = jnp.einsum('cw,pq->cpwq', wl / t_out, jnp.eye(p_out, dtype=jnp.float32))
    wl5 = jnp.broadcast_to(wl4[:, :, :, None, :],
                           (n_cls, p_out, width, t_out, p_out))
    wl_full = wl5.reshape(n_cls * p_out, width * t_out * p_out)
    bl_full = jnp.repeat(bl, p_out)

    # Block-diagonal expansion over the width axis (pure batch axis for the convs).
    # TODO(synk): for large temporal_out this kron grows as W^2 and wastes MXU
    #             FLOPs on structural zeros; move W onto the grid as an
    #             'arbitrary' reduction axis with a VMEM accumulator instead.
    eye_w = jnp.eye(width, dtype=jnp.float32)
    w1_full = jnp.kron(eye_w, w1_big)                     # (k2, k1)
    w2_full = jnp.kron(eye_w, w2_big)                     # (k3, k2)
    s1_full = jnp.tile(jnp.repeat(s1, depth), width)      # (k2,)
    s2_full = jnp.tile(jnp.repeat(s2, p_out), width)      # (k3,)

    k1 = width * c_in * depth
    k2 = width * p_out * depth
    k3 = width * t_out * p_out
    cp = n_cls * p_out

    # Pad contraction/row dims to multiples of 256 (v6e/v7x MXU tile); the +1
    # bias-trick rows live inside the padding.  Output rows only need x8.
    K1 = _round_up(k1 + 1, 256)
    K2 = _round_up(k2 + 1, 256)
    K3 = _round_up(k3 + 1, 256)
    CP = _round_up(cp, 8)

    w1a = jnp.zeros((K2, K1), jnp.float32)
    w1a = w1a.at[:k2, :k1].set(w1_full).at[:k2, k1].set(s1_full).at[k2, k1].set(1.0)
    w2a = jnp.zeros((K3, K2), jnp.float32)
    w2a = w2a.at[:k3, :k2].set(w2_full).at[:k3, k2].set(s2_full).at[k3, k2].set(1.0)
    wla = jnp.zeros((CP, K3), jnp.float32)
    wla = wla.at[:cp, :k3].set(wl_full).at[:cp, k3].set(bl_full)

    return (w1a.astype(jnp.bfloat16), w2a.astype(jnp.bfloat16),
            wla.astype(jnp.bfloat16), (k1, K1, K2, K3, CP, cp))


@partial(jax.jit, static_argnames=("tile_r",))
def sign_video_transformer(x, params, *, tile_r=1024):
    n, c_in, d, h, w = x.shape
    p_out = params['w1'].shape[0]
    t_out = params['w2'].shape[0]
    n_cls = params['wl'].shape[0]
    # Shape constraints forced by the module's forward.
    assert d == p_out, "permute(0,2,1,3,4) requires depth == pos_out"
    assert w == t_out and params['wl'].shape[1] == t_out, \
        "Linear(temporal_out, .) requires W == temporal_out"

    w1a, w2a, wla, (k1, K1, K2, K3, CP, cp) = _build_fused_weights(params, d, w)

    # Layout plumbing: big pure-batch axis R = N*H goes on lanes; rows are
    # (w, c_in, depth).  bf16 cast fuses with the transpose so x is read once in
    # f32 and written once in bf16 before the kernel streams it.
    # TODO(synk): remove this transpose by producing x in (W,C,D,N,H) layout
    #             upstream (or by putting W on the grid with strided DMA).
    r = n * h
    xk = jnp.transpose(x, (4, 1, 2, 0, 3)).reshape(k1, r).astype(jnp.bfloat16)

    # Tile choice: lane-dense multiple of 128; tiny R collapses to one step.
    tr = _round_up(min(tile_r, _round_up(r, 128)), 128)
    r_pad = _round_up(r, tr)

    # Pad rows to K1 (bias-trick row at index k1 = constant 1) and columns to
    # the grid size.  Padded columns produce garbage that is sliced off below.
    xk = jnp.pad(xk, ((0, K1 - k1), (0, r_pad - r)))
    xk = xk.at[k1, :].set(1.0)

    out = _fused_forward(xk, w1a, w2a, wla, tile_r=tr, cp_rows=CP)
    out = out[:cp, :r].reshape(n_cls, p_out, n, h)
    return jnp.transpose(out, (2, 1, 3, 0))               # (N, pos_out, H, num_classes)


# ---------------------------------------------------------------------------
# Deterministic parameter init (shapes follow the module's __init__)
# ---------------------------------------------------------------------------
def init_params(key, pos_in, pos_out, temporal_out, num_classes):
    ks = jax.random.split(key, 10)
    u = lambda k, shape, lo, hi: jax.random.uniform(k, shape, jnp.float32, lo, hi)
    # TODO(synk): PositionTransformer.row_embed / .pos params are unused in forward; omitted.
    # TODO(synk): BatchNorm3d is evaluated in eval mode (running stats); training-mode
    #             batch statistics are not implemented.
    return {
        'w1': u(ks[0], (pos_out, pos_in, 3, 1, 1), -0.3, 0.3),
        'b1': u(ks[1], (pos_out,), -0.1, 0.1),
        'g1': u(ks[2], (pos_out,), 0.5, 1.5),
        'be1': u(ks[3], (pos_out,), -0.1, 0.1),
        'rm1': jnp.zeros((pos_out,), jnp.float32),
        'rv1': jnp.ones((pos_out,), jnp.float32),
        'w2': u(ks[4], (temporal_out, pos_out, 3, 1, 1), -0.3, 0.3),
        'b2': u(ks[5], (temporal_out,), -0.1, 0.1),
        'g2': u(ks[6], (temporal_out,), 0.5, 1.5),
        'be2': u(ks[7], (temporal_out,), -0.1, 0.1),
        'rm2': jnp.zeros((temporal_out,), jnp.float32),
        'rv2': jnp.ones((temporal_out,), jnp.float32),
        'wl': u(ks[8], (num_classes, temporal_out), -0.3, 0.3),
        'bl': u(ks[9], (num_classes,), -0.1, 0.1),
    }


# ---------------------------------------------------------------------------
# Pure-JAX f32 reference (module semantics) for verification
# ---------------------------------------------------------------------------
def ref_forward(x, p):
    hp = jax.lax.Precision.HIGHEST

    def stage(x, w, b, gamma, beta, rm, rv):
        d = x.shape[2]
        xp = jnp.pad(x, ((0, 0), (0, 0), (1, 1), (0, 0), (0, 0)))
        y = sum(jnp.einsum('ncdhw,oc->nodhw', xp[:, :, kd:kd + d],
                           w[:, :, kd, 0, 0], precision=hp)
                for kd in range(3))
        y = y + b[None, :, None, None, None]
        y = ((y - rm[None, :, None, None, None]) / jnp.sqrt(rv + EPS)[None, :, None, None, None]
             * gamma[None, :, None, None, None] + beta[None, :, None, None, None])
        return jnp.maximum(y, 0.0)

    y = stage(x, p['w1'], p['b1'], p['g1'], p['be1'], p['rm1'], p['rv1'])
    y = jnp.transpose(y, (0, 2, 1, 3, 4))
    y = stage(y, p['w2'], p['b2'], p['g2'], p['be2'], p['rm2'], p['rv2'])
    y = jnp.mean(y, axis=1)
    return jnp.einsum('nphw,cw->nphc', y, p['wl'], precision=hp) + p['bl']


if __name__ == "__main__":
    hidden_dim, num_heads = 32, 4
    num_classes = 10
    pos_in, pos_out, temporal_out = 4, 8, 6
    assert hidden_dim % num_heads == 0, 'model dimensions must be divisible by number of heads'

    # Shapes forced by the module's forward: D == pos_out, W == temporal_out.
    # H chosen so R = N*H = 2200 exercises multiple lane-dense grid steps at the
    # default tile_r=1024 plus the ragged-R padding path.
    n, d, h, w = 2, pos_out, 1100, temporal_out

    key = jax.random.PRNGKey(0)
    kx, kp = jax.random.split(key)
    x = jax.random.normal(kx, (n, pos_in, d, h, w), jnp.float32)
    params = init_params(kp, pos_in, pos_out, temporal_out, num_classes)

    out = jax.block_until_ready(sign_video_transformer(x, params))
    ref = ref_forward(x, params)

    assert out.shape == (n, pos_out, h, num_classes), out.shape
    # bf16 operands vs f32 reference: expected max abs error ~1e-2; a structural
    # bug would produce O(0.5)+ errors, so this tolerance still separates cleanly.
    if not jnp.allclose(out, ref, atol=3e-2, rtol=3e-2):
        err = float(jnp.max(jnp.abs(out - ref)))
        raise AssertionError(f"Pallas output does not match reference (max abs err {err})")
    print("KERNEL_OK")
</pallas_src>

<mosaic_0001>
module attributes {stable_mosaic.version = 11 : i64} {
  func.func @_fused_kernel(%arg0: i32, %arg1: memref<256x1024xbf16, #tpu.memory_space<vmem>>, %arg2: memref<512x256xbf16, #tpu.memory_space<vmem>>, %arg3: memref<512x512xbf16, #tpu.memory_space<vmem>>, %arg4: memref<80x512xbf16, #tpu.memory_space<vmem>>, %arg5: memref<80x1024xf32, #tpu.memory_space<vmem>>) attributes {dimension_semantics = [#tpu.dimension_semantics<parallel>], iteration_bounds = array<i64: 3>, scalar_prefetch = 0 : i64, scratch_operands = 0 : i64, tpu.core_type = #tpu.core_type<tc>, window_params = [{transform_indices = @transform_0, window_bounds = array<i64: 256, 1024>}, {pipeline_mode = #tpu.pipeline_mode<synchronous>, transform_indices = @transform_1, window_bounds = array<i64: 512, 256>}, {pipeline_mode = #tpu.pipeline_mode<synchronous>, transform_indices = @transform_2, window_bounds = array<i64: 512, 512>}, {pipeline_mode = #tpu.pipeline_mode<synchronous>, transform_indices = @transform_3, window_bounds = array<i64: 80, 512>}, {transform_indices = @transform_4, window_bounds = array<i64: 80, 1024>}]} {
    %c0 = arith.constant 0 : index
    %c0_0 = arith.constant 0 : index
    %0 = vector.load %arg2[%c0, %c0_0] : memref<512x256xbf16, #tpu.memory_space<vmem>>, vector<512x256xbf16>
    %c0_1 = arith.constant 0 : index
    %c0_2 = arith.constant 0 : index
    %1 = vector.load %arg1[%c0_1, %c0_2] : memref<256x1024xbf16, #tpu.memory_space<vmem>>, vector<256x1024xbf16>
    %cst = arith.constant dense<0.000000e+00> : vector<512x1024xf32>
    %2 = tpu.matmul %0, %1, %cst {dimension_numbers = #tpu.dot_dimension_numbers<[1], [0], [0], [1], [0, 0, 1, 1], [], []>} : vector<512x256xbf16>, vector<256x1024xbf16>, vector<512x1024xf32> -> vector<512x1024xf32>
    %cst_3 = arith.constant 0.000000e+00 : f32
    %3 = vector.broadcast %cst_3 : f32 to vector<512x1024xf32>
    %4 = arith.maximumf %2, %3 : vector<512x1024xf32>
    %5 = arith.truncf %4 : vector<512x1024xf32> to vector<512x1024xbf16>
    %c0_4 = arith.constant 0 : index
    %c0_5 = arith.constant 0 : index
    %6 = vector.load %arg3[%c0_4, %c0_5] : memref<512x512xbf16, #tpu.memory_space<vmem>>, vector<512x512xbf16>
    %cst_6 = arith.constant dense<0.000000e+00> : vector<512x1024xf32>
    %7 = tpu.matmul %6, %5, %cst_6 {dimension_numbers = #tpu.dot_dimension_numbers<[1], [0], [0], [1], [0, 0, 1, 1], [], []>} : vector<512x512xbf16>, vector<512x1024xbf16>, vector<512x1024xf32> -> vector<512x1024xf32>
    %cst_7 = arith.constant 0.000000e+00 : f32
    %8 = vector.broadcast %cst_7 : f32 to vector<512x1024xf32>
    %9 = arith.maximumf %7, %8 : vector<512x1024xf32>
    %10 = arith.truncf %9 : vector<512x1024xf32> to vector<512x1024xbf16>
    %c0_8 = arith.constant 0 : index
    %c0_9 = arith.constant 0 : index
    %11 = vector.load %arg4[%c0_8, %c0_9] : memref<80x512xbf16, #tpu.memory_space<vmem>>, vector<80x512xbf16>
    %cst_10 = arith.constant dense<0.000000e+00> : vector<80x1024xf32>
    %12 = tpu.matmul %11, %10, %cst_10 {dimension_numbers = #tpu.dot_dimension_numbers<[1], [0], [0], [1], [0, 0, 1, 1], [], []>} : vector<80x512xbf16>, vector<512x1024xbf16>, vector<80x1024xf32> -> vector<80x1024xf32>
    %c0_11 = arith.constant 0 : index
    %c0_12 = arith.constant 0 : index
    %13 = vector.load %arg5[%c0_11, %c0_12] : memref<80x1024xf32, #tpu.memory_space<vmem>>, vector<80x1024xf32>
    tpu.vector_store %arg5[%c0_11, %c0_12], %12 {strides = array<i32>} : memref<80x1024xf32, #tpu.memory_space<vmem>>, vector<80x1024xf32>,
    return
  }
  func.func @transform_0(%arg0: i32) -> (i32, i32) {
    %c0_i32 = arith.constant 0 : i32
    %c0_i32_0 = arith.constant 0 : i32
    return %c0_i32, %arg0 : i32, i32
  }
  func.func @transform_1(%arg0: i32) -> (i32, i32) {
    %c0_i32 = arith.constant 0 : i32
    %c0_i32_0 = arith.constant 0 : i32
    %c0_i32_1 = arith.constant 0 : i32
    return %c0_i32, %c0_i32_0 : i32, i32
  }
  func.func @transform_2(%arg0: i32) -> (i32, i32) {
    %c0_i32 = arith.constant 0 : i32
    %c0_i32_0 = arith.constant 0 : i32
    %c0_i32_1 = arith.constant 0 : i32
    return %c0_i32, %c0_i32_0 : i32, i32
  }
  func.func @transform_3(%arg0: i32) -> (i32, i32) {
    %c0_i32 = arith.constant 0 : i32
    %c0_i32_0 = arith.constant 0 : i32
    %c0_i32_1 = arith.constant 0 : i32
    return %c0_i32, %c0_i32_0 : i32, i32
  }
  func.func @transform_4(%arg0: i32) -> (i32, i32) {
    %c0_i32 = arith.constant 0 : i32
    %c0_i32_0 = arith.constant 0 : i32
    return %c0_i32, %arg0 : i32, i32
  }
}

</mosaic_0001>

<llo_original>
// kernel: mul.4
$region0: #{mul.4}
  %s0 = inlined_call_operand.vmem [shape: f32[8,8,4,8], index: 0, kind: input, shape index: {}]
  %s1 = inlined_call_operand.vmem [shape: f32[64,32], index: 1, kind: output, shape index: {}]
  %v2 = vld [vmem:[%s0] ss:$8 sm:$0xf]
  %v3 = vld [vmem:[%s0] ss:$8 sm:$0xf0]
  %vm4 = vcmask 1047556
  %v5 = vsel %vm4, %v3, %v2
  %vm6 = vcmask 64512
  %7 = vst.msk [vmem:[%s1] sm:$0xff] %vm6, %v5
  %s8 = scalar_lea.vmem %s0, 64
  %v9 = vld [vmem:[%s8] ss:$8 sm:$0xf]
  %s10 = scalar_lea.vmem %s0, 64
  %v11 = vld [vmem:[%s10] ss:$8 sm:$0xf0]
  %vm12 = vcmask 1047556
  %v13 = vsel %vm12, %v11, %v9
  %vm14 = vcmask 64512
  %s15 = scalar_lea.vmem %s1, 8
  %16 = vst.msk [vmem:[%s15] sm:$0xff] %vm14, %v13
  %s17 = scalar_lea.vmem %s0, 128
  %v18 = vld [vmem:[%s17] ss:$8 sm:$0xf]
  %s19 = scalar_lea.vmem %s0, 128
  %v20 = vld [vmem:[%s19] ss:$8 sm:$0xf0]
  %vm21 = vcmask 1047556
  %v22 = vsel %vm21, %v20, %v18
  %vm23 = vcmask 64512
  %s24 = scalar_lea.vmem %s1, 16
  %25 = vst.msk [vmem:[%s24] sm:$0xff] %vm23, %v22
  %s26 = scalar_lea.vmem %s0, 192
  %v27 = vld [vmem:[%s26] ss:$8 sm:$0xf]
  %s28 = scalar_lea.vmem %s0, 192
  %v29 = vld [vmem:[%s28] ss:$8 sm:$0xf0]
  %vm30 = vcmask 1047556
  %v31 = vsel %vm30, %v29, %v27
  %vm32 = vcmask 64512
  %s33 = scalar_lea.vmem %s1, 24
  %34 = vst.msk [vmem:[%s33] sm:$0xff] %vm32, %v31
  %s35 = scalar_lea.vmem %s0, 7
  %v36 = vld [vmem:[%s35] ss:$8 sm:$0xf]
  %s37 = scalar_lea.vmem %s0, 7
  %v38 = vld [vmem:[%s37] ss:$8 sm:$0xf0]
  %vm39 = vcmask 1047556
  %v40 = vsel %vm39, %v38, %v36
  %41 = vrot.lane.b32.xlu0 %v40, 56
  %v42 = vpop.permute.xlu0 %41
  %vm43 = vcmask 523712
  %44 = vst.msk [vmem:[%s1] sm:$0xff] %vm43, %v42
  %s45 = scalar_lea.vmem %s0, 71
  %v46 = vld [vmem:[%s45] ss:$8 sm:$0xf]
  %s47 = scalar_lea.vmem %s0, 71
  %v48 = vld [vmem:[%s47] ss:$8 sm:$0xf0]
  %vm49 = vcmask 1047556
  %v50 = vsel %vm49, %v48, %v46
  %51 = vrot.lane.b32.xlu0 %v50, 56
  %v52 = vpop.permute.xlu0 %51
  %vm53 = vcmask 523712
  %s54 = scalar_lea.vmem %s1, 8
  %55 = vst.msk [vmem:[%s54] sm:$0xff] %vm53, %v52
  %s56 = scalar_lea.vmem %s0, 135
  %v57 = vld [vmem:[%s56] ss:$8 sm:$0xf]
  %s58 = scalar_lea.vmem %s0, 135
  %v59 = vld [vmem:[%s58] ss:$8 sm:$0xf0]
  %vm60 = vcmask 1047556
  %v61 = vsel %vm60, %v59, %v57
  %62 = vrot.lane.b32.xlu0 %v61, 56
  %v63 = vpop.permute.xlu0 %62
  %vm64 = vcmask 523712
  %s65 = scalar_lea.vmem %s1, 16
  %66 = vst.msk [vmem:[%s65] sm:$0xff] %vm64, %v63
  %s67 = scalar_lea.vmem %s0, 199
  %v68 = vld [vmem:[%s67] ss:$8 sm:$0xf]
  %s69 = scalar_lea.vmem %s0, 199
  %v70 = vld [vmem:[%s69] ss:$8 sm:$0xf0]
  %vm71 = vcmask 1047556
  %v72 = vsel %vm71, %v70, %v68
  %73 = vrot.lane.b32.xlu0 %v72, 56
  %v74 = vpop.permute.xlu0 %73
  %vm75 = vcmask 523712
  %s76 = scalar_lea.vmem %s1, 24
  %77 = vst.msk [vmem:[%s76] sm:$0xff] %vm75, %v74
  %s78 = scalar_lea.vmem %s0, 6
  %v79 = vld [vmem:[%s78] ss:$8 sm:$0xf]
  %s80 = scalar_lea.vmem %s0, 6
  %v81 = vld [vmem:[%s80] ss:$8 sm:$0xf0]
  %vm82 = vcmask 1047556
  %v83 = vsel %vm82, %v81, %v79
  %84 = vrot.lane.b32.xlu0 %v83, 48
  %v85 = vpop.permute.xlu0 %84
  %vm86 = vcmask 458112
  %87 = vst.msk [vmem:[%s1] sm:$0xff] %vm86, %v85
  %s88 = scalar_lea.vmem %s0, 70
  %v89 = vld [vmem:[%s88] ss:$8 sm:$0xf]
  %s90 = scalar_lea.vmem %s0, 70
  %v91 = vld [vmem:[%s90] ss:$8 sm:$0xf0]
  %vm92 = vcmask 1047556
  %v93 = vsel %vm92, %v91, %v89
  %94 = vrot.lane.b32.xlu0 %v93, 48
  %v95 = vpop.permute.xlu0 %94
  %vm96 = vcmask 458112
  %s97 = scalar_lea.vmem %s1, 8
  %98 = vst.msk [vmem:[%s97] sm:$0xff] %vm96, %v95
  %s99 = scalar_lea.vmem %s0, 134
  %v100 = vld [vmem:[%s99] ss:$8 sm:$0xf]
  %s101 = scalar_lea.vmem %s0, 134
  %v102 = vld [vmem:[%s101] ss:$8 sm:$0xf0]
  %vm103 = vcmask 1047556
  %v104 = vsel %vm103, %v102, %v100
  %105 = vrot.lane.b32.xlu0 %v104, 48
  %v106 = vpop.permute.xlu0 %105
  %vm107 = vcmask 458112
  %s108 = scalar_lea.vmem %s1, 16
  %109 = vst.msk [vmem:[%s108] sm:$0xff] %vm107, %v106
  %s110 = scalar_lea.vmem %s0, 198
  %v111 = vld [vmem:[%s110] ss:$8 sm:$0xf]
  %s112 = scalar_lea.vmem %s0, 198
  %v113 = vld [vmem:[%s112] ss:$8 sm:$0xf0]
  %vm114 = vcmask 1047556
  %v115 = vsel %vm114, %v113, %v111
  %116 = vrot.lane.b32.xlu0 %v115, 48
  %v117 = vpop.permute.xlu0 %116
  %vm118 = vcmask 458112
  %s119 = scalar_lea.vmem %s1, 24
  %120 = vst.msk [vmem:[%s119] sm:$0xff] %vm118, %v117
  %s121 = scalar_lea.vmem %s0, 5
  %v122 = vld [vmem:[%s121] ss:$8 sm:$0xf]
  %s123 = scalar_lea.vmem %s0, 5
  %v124 = vld [vmem:[%s123] ss:$8 sm:$0xf0]
  %vm125 = vcmask 1047556
  %v126 = vsel %vm125, %v124, %v122
  %127 = vrot.lane.b32.xlu0 %v126, 40
  %v128 = vpop.permute.xlu0 %127
  %vm129 = vcmask 392512
  %130 = vst.msk [vmem:[%s1] sm:$0xff] %vm129, %v128
  %s131 = scalar_lea.vmem %s0, 69
  %v132 = vld [vmem:[%s131] ss:$8 sm:$0xf]
  %s133 = scalar_lea.vmem %s0, 69
  %v134 = vld [vmem:[%s133] ss:$8 sm:$0xf0]
  %vm135 = vcmask 1047556
  %v136 = vsel %vm135, %v134, %v132
  %137 = vrot.lane.b32.xlu0 %v136, 40
  %v138 = vpop.permute.xlu0 %137
  %vm139 = vcmask 392512
  %s140 = scalar_lea.vmem %s1, 8
  %141 = vst.msk [vmem:[%s140] sm:$0xff] %vm139, %v138
  %s142 = scalar_lea.vmem %s0, 133
  %v143 = vld [vmem:[%s142] ss:$8 sm:$0xf]
  %s144 = scalar_lea.vmem %s0, 133
  %v145 = vld [vmem:[%s144] ss:$8 sm:$0xf0]
  %vm146 = vcmask 1047556
  %v147 = vsel %vm146, %v145, %v143
  %148 = vrot.lane.b32.xlu0 %v147, 40
  %v149 = vpop.permute.xlu0 %148
  %vm150 = vcmask 392512
  %s151 = scalar_lea.vmem %s1, 16
  %152 = vst.msk [vmem:[%s151] sm:$0xff] %vm150, %v149
  %s153 = scalar_lea.vmem %s0, 197
  %v154 = vld [vmem:[%s153] ss:$8 sm:$0xf]
  %s155 = scalar_lea.vmem %s0, 197
  %v156 = vld [vmem:[%s155] ss:$8 sm:$0xf0]
  %vm157 = vcmask 1047556
  %v158 = vsel %vm157, %v156, %v154
  %159 = vrot.lane.b32.xlu0 %v158, 40
  %v160 = vpop.permute.xlu0 %159
  %vm161 = vcmask 392512
  %s162 = scalar_lea.vmem %s1, 24
  %163 = vst.msk [vmem:[%s162] sm:$0xff] %vm161, %v160
  %s164 = scalar_lea.vmem %s0, 4
  %v165 = vld [vmem:[%s164] ss:$8 sm:$0xf]
  %s166 = scalar_lea.vmem %s0, 4
  %v167 = vld [vmem:[%s166] ss:$8 sm:$0xf0]
  %vm168 = vcmask 1047556
  %v169 = vsel %vm168, %v167, %v165
  %170 = vrot.lane.b32.xlu0 %v169, 32
  %v171 = vpop.permute.xlu0 %170
  %vm172 = vcmask 326912
  %173 = vst.msk [vmem:[%s1] sm:$0xff] %vm172, %v171
  %s174 = scalar_lea.vmem %s0, 68
  %v175 = vld [vmem:[%s174] ss:$8 sm:$0xf]
  %s176 = scalar_lea.vmem %s0, 68
  %v177 = vld [vmem:[%s176] ss:$8 sm:$0xf0]
  %vm178 = vcmask 1047556
  %v179 = vsel %vm178, %v177, %v175
  %180 = vrot.lane.b32.xlu0 %v179, 32
  %v181 = vpop.permute.xlu0 %180
  %vm182 = vcmask 326912
  %s183 = scalar_lea.vmem %s1, 8
  %184 = vst.msk [vmem:[%s183] sm:$0xff] %vm182, %v181
  %s185 = scalar_lea.vmem %s0, 132
  %v186 = vld [vmem:[%s185] ss:$8 sm:$0xf]
  %s187 = scalar_lea.vmem %s0, 132
  %v188 = vld [vmem:[%s187] ss:$8 sm:$0xf0]
  %vm189 = vcmask 1047556
  %v190 = vsel %vm189, %v188, %v186
  %191 = vrot.lane.b32.xlu0 %v190, 32
  %v192 = vpop.permute.xlu0 %191
  %vm193 = vcmask 326912
  %s194 = scalar_lea.vmem %s1, 16
  %195 = vst.msk [vmem:[%s194] sm:$0xff] %vm193, %v192
  %s196 = scalar_lea.vmem %s0, 196
  %v197 = vld [vmem:[%s196] ss:$8 sm:$0xf]
  %s198 = scalar_lea.vmem %s0, 196
  %v199 = vld [vmem:[%s198] ss:$8 sm:$0xf0]
  %vm200 = vcmask 1047556
  %v201 = vsel %vm200, %v199, %v197
  %202 = vrot.lane.b32.xlu0 %v201, 32
  %v203 = vpop.permute.xlu0 %202
  %vm204 = vcmask 326912
  %s205 = scalar_lea.vmem %s1, 24
  %206 = vst.msk [vmem:[%s205] sm:$0xff] %vm204, %v203
  %s207 = scalar_lea.vmem %s0, 3
  %v208 = vld [vmem:[%s207] ss:$8 sm:$0xf]
  %s209 = scalar_lea.vmem %s0, 3
  %v210 = vld [vmem:[%s209] ss:$8 sm:$0xf0]
  %vm211 = vcmask 1047556
  %v212 = vsel %vm211, %v210, %v208
  %213 = vrot.lane.b32.xlu0 %v212, 24
  %v214 = vpop.permute.xlu0 %213
  %vm215 = vcmask 261312
  %216 = vst.msk [vmem:[%s1] sm:$0xff] %vm215, %v214
  %s217 = scalar_lea.vmem %s0, 67
  %v218 = vld [vmem:[%s217] ss:$8 sm:$0xf]
  %s219 = scalar_lea.vmem %s0, 67
  %v220 = vld [vmem:[%s219] ss:$8 sm:$0xf0]
  %vm221 = vcmask 1047556
  %v222 = vsel %vm221, %v220, %v218
  %223 = vrot.lane.b32.xlu0 %v222, 24
  %v224 = vpop.permute.xlu0 %223
  %vm225 = vcmask 261312
  %s226 = scalar_lea.vmem %s1, 8
  %227 = vst.msk [vmem:[%s226] sm:$0xff] %vm225, %v224
  %s228 = scalar_lea.vmem %s0, 131
  %v229 = vld [vmem:[%s228] ss:$8 sm:$0xf]
  %s230 = scalar_lea.vmem %s0, 131
  %v231 = vld [vmem:[%s230] ss:$8 sm:$0xf0]
  %vm232 = vcmask 1047556
  %v233 = vsel %vm232, %v231, %v229
  %234 = vrot.lane.b32.xlu0 %v233, 24
  %v235 = vpop.permute.xlu0 %234
  %vm236 = vcmask 261312
  %s237 = scalar_lea.vmem %s1, 16
  %238 = vst.msk [vmem:[%s237] sm:$0xff] %vm236, %v235
  %s239 = scalar_lea.vmem %s0, 195
  %v240 = vld [vmem:[%s239] ss:$8 sm:$0xf]
  %s241 = scalar_lea.vmem %s0, 195
  %v242 = vld [vmem:[%s241] ss:$8 sm:$0xf0]
  %vm243 = vcmask 1047556
  %v244 = vsel %vm243, %v242, %v240
  %245 = vrot.lane.b32.xlu0 %v244, 24
  %v246 = vpop.permute.xlu0 %245
  %vm247 = vcmask 261312
  %s248 = scalar_lea.vmem %s1, 24
  %249 = vst.msk [vmem:[%s248] sm:$0xff] %vm247, %v246
  %s250 = scalar_lea.vmem %s0, 2
  %v251 = vld [vmem:[%s250] ss:$8 sm:$0xf]
  %s252 = scalar_lea.vmem %s0, 2
  %v253 = vld [vmem:[%s252] ss:$8 sm:$0xf0]
  %vm254 = vcmask 1047556
  %v255 = vsel %vm254, %v253, %v251
  %256 = vrot.lane.b32.xlu0 %v255, 16
  %v257 = vpop.permute.xlu0 %256
  %vm258 = vcmask 195712
  %259 = vst.msk [vmem:[%s1] sm:$0xff] %vm258, %v257
  %s260 = scalar_lea.vmem %s0, 66
  %v261 = vld [vmem:[%s260] ss:$8 sm:$0xf]
  %s262 = scalar_lea.vmem %s0, 66
  %v263 = vld [vmem:[%s262] ss:$8 sm:$0xf0]
  %vm264 = vcmask 1047556
  %v265 = vsel %vm264, %v263, %v261
  %266 = vrot.lane.b32.xlu0 %v265, 16
  %v267 = vpop.permute.xlu0 %266
  %vm268 = vcmask 195712
  %s269 = scalar_lea.vmem %s1, 8
  %270 = vst.msk [vmem:[%s269] sm:$0xff] %vm268, %v267
  %s271 = scalar_lea.vmem %s0, 130
  %v272 = vld [vmem:[%s271] ss:$8 sm:$0xf]
  %s273 = scalar_lea.vmem %s0, 130
  %v274 = vld [vmem:[%s273] ss:$8 sm:$0xf0]
  %vm275 = vcmask 1047556
  %v276 = vsel %vm275, %v274, %v272
  %277 = vrot.lane.b32.xlu0 %v276, 16
  %v278 = vpop.permute.xlu0 %277
  %vm279 = vcmask 195712
  %s280 = scalar_lea.vmem %s1, 16
  %281 = vst.msk [vmem:[%s280] sm:$0xff] %vm279, %v278
  %s282 = scalar_lea.vmem %s0, 194
  %v283 = vld [vmem:[%s282] ss:$8 sm:$0xf]
  %s284 = scalar_lea.vmem %s0, 194
  %v285 = vld [vmem:[%s284] ss:$8 sm:$0xf0]
  %vm286 = vcmask 1047556
  %v287 = vsel %vm286, %v285, %v283
  %288 = vrot.lane.b32.xlu0 %v287, 16
  %v289 = vpop.permute.xlu0 %288
  %vm290 = vcmask 195712
  %s291 = scalar_lea.vmem %s1, 24
  %292 = vst.msk [vmem:[%s291] sm:$0xff] %vm290, %v289
  %s293 = scalar_lea.vmem %s0, 1
  %v294 = vld [vmem:[%s293] ss:$8 sm:$0xf]
  %s295 = scalar_lea.vmem %s0, 1
  %v296 = vld [vmem:[%s295] ss:$8 sm:$0xf0]
  %vm297 = vcmask 1047556
  %v298 = vsel %vm297, %v296, %v294
  %299 = vrot.lane.b32.xlu0 %v298, 8
  %v300 = vpop.permute.xlu0 %299
  %vm301 = vcmask 130112
  %302 = vst.msk [vmem:[%s1] sm:$0xff] %vm301, %v300
  %s303 = scalar_lea.vmem %s0, 65
  %v304 = vld [vmem:[%s303] ss:$8 sm:$0xf]
  %s305 = scalar_lea.vmem %s0, 65
  %v306 = vld [vmem:[%s305] ss:$8 sm:$0xf0]
  %vm307 = vcmask 1047556
  %v308 = vsel %vm307, %v306, %v304
  %309 = vrot.lane.b32.xlu0 %v308, 8
  %v310 = vpop.permute.xlu0 %309
  %vm311 = vcmask 130112
  %s312 = scalar_lea.vmem %s1, 8
  %313 = vst.msk [vmem:[%s312] sm:$0xff] %vm311, %v310
  %s314 = scalar_lea.vmem %s0, 129
  %v315 = vld [vmem:[%s314] ss:$8 sm:$0xf]
  %s316 = scalar_lea.vmem %s0, 129
  %v317 = vld [vmem:[%s316] ss:$8 sm:$0xf0]
  %vm318 = vcmask 1047556
  %v319 = vsel %vm318, %v317, %v315
  %320 = vrot.lane.b32.xlu0 %v319, 8
  %v321 = vpop.permute.xlu0 %320
  %vm322 = vcmask 130112
  %s323 = scalar_lea.vmem %s1, 16
  %324 = vst.msk [vmem:[%s323] sm:$0xff] %vm322, %v321
  %s325 = scalar_lea.vmem %s0, 193
  %v326 = vld [vmem:[%s325] ss:$8 sm:$0xf]
  %s327 = scalar_lea.vmem %s0, 193
  %v328 = vld [vmem:[%s327] ss:$8 sm:$0xf0]
  %vm329 = vcmask 1047556
  %v330 = vsel %vm329, %v328, %v326
  %331 = vrot.lane.b32.xlu0 %v330, 8
  %v332 = vpop.permute.xlu0 %331
  %vm333 = vcmask 130112
  %s334 = scalar_lea.vmem %s1, 24
  %335 = vst.msk [vmem:[%s334] sm:$0xff] %vm333, %v332

// kernel: tile.9
$region0: #{tile.9}
  %s0 = inlined_call_operand.vmem [shape: bf16[8,8], index: 0, kind: input, shape index: {}]
  %s1 = inlined_call_operand.vmem [shape: bf16[64], index: 1, kind: output, shape index: {}]
  $region1: #{tile.9} parent=0
    #allocation0 [shape = 'u8[4096]{0}', space=vmem, size = 0x1000, scoped, tag = 'scoped mem for output reshape']
    #allocation1 [shape = 'u8[4096]{0}', space=vmem, size = 0x1000, scoped, tag = 'scoped mem for input reshape']
    %s3 = smul.u32 4, 2
    %s4 = sshll.u32 1, %s3
    %s5 = ssub.s32 %s4, 1
    %s6 = sshrl.u32 %s5, 1
    %s7 = sor.u32 %s5, %s6
    %s8 = sand.u32 %s7, 85
    %s9 = sshrl.u32 %s8, 1
    %s10 = sor.u32 %s8, %s9
    %s11 = sand.u32 51, %s10
    %s12 = sshrl.u32 %s11, 2
    %s13 = sor.u32 %s11, %s12
    %s14 = sand.u32 15, %s13
    %v15 = vld [vmem:[%s0] sm:%s14]
    %v16 = vunpack.c.l.bf16 %v15
    %v17 = vunpack.c.h.bf16 %v15
    %18 = vst [vmem:[#allocation1] sm:%s5] %v16
    %v19 = vld [vmem:[#allocation1] sm:$0x1]
    %vm20 = vcmask 64512
    %21 = vst.msk [vmem:[#allocation0] sm:$0x1] %vm20, %v19
    %s22 = scalar_lea.vmem [#allocation1], 7
    %v23 = vld [vmem:[%s22] sm:$0x1]
    %24 = vrot.lane.b32.xlu0 %v23, 56
    %v25 = vpop.permute.xlu0 %24
    %vm26 = vcmask 523712
    %27 = vst.msk [vmem:[#allocation0] sm:$0x1] %vm26, %v25
    %s28 = scalar_lea.vmem [#allocation1], 6
    %v29 = vld [vmem:[%s28] sm:$0x1]
    %30 = vrot.lane.b32.xlu0 %v29, 48
    %v31 = vpop.permute.xlu0 %30
    %vm32 = vcmask 458112
    %33 = vst.msk [vmem:[#allocation0] sm:$0x1] %vm32, %v31
    %s34 = scalar_lea.vmem [#allocation1], 5
    %v35 = vld [vmem:[%s34] sm:$0x1]
    %36 = vrot.lane.b32.xlu0 %v35, 40
    %v37 = vpop.permute.xlu0 %36
    %vm38 = vcmask 392512
    %39 = vst.msk [vmem:[#allocation0] sm:$0x1] %vm38, %v37
    %s40 = scalar_lea.vmem [#allocation1], 4
    %v41 = vld [vmem:[%s40] sm:$0x1]
    %42 = vrot.lane.b32.xlu0 %v41, 32
    %v43 = vpop.permute.xlu0 %42
    %vm44 = vcmask 326912
    %45 = vst.msk [vmem:[#allocation0] sm:$0x1] %vm44, %v43
    %s46 = scalar_lea.vmem [#allocation1], 3
    %v47 = vld [vmem:[%s46] sm:$0x1]
    %48 = vrot.lane.b32.xlu0 %v47, 24
    %v49 = vpop.permute.xlu0 %48
    %vm50 = vcmask 261312
    %51 = vst.msk [vmem:[#allocation0] sm:$0x1] %vm50, %v49
    %s52 = scalar_lea.vmem [#allocation1], 2
    %v53 = vld [vmem:[%s52] sm:$0x1]
    %54 = vrot.lane.b32.xlu0 %v53, 16
    %v55 = vpop.permute.xlu0 %54
    %vm56 = vcmask 195712
    %57 = vst.msk [vmem:[#allocation0] sm:$0x1] %vm56, %v55
    %s58 = scalar_lea.vmem [#allocation1], 1
    %v59 = vld [vmem:[%s58] sm:$0x1]
    %60 = vrot.lane.b32.xlu0 %v59, 8
    %v61 = vpop.permute.xlu0 %60
    %vm62 = vcmask 130112
    %63 = vst.msk [vmem:[#allocation0] sm:$0x1] %vm62, %v61
    %s65 = smul.u32 1, 2
    %s66 = sshll.u32 1, %s65
    %s67 = ssub.s32 %s66, 1
    %s68 = sshrl.u32 %s65, 1
    %v69 = vld [vmem:[#allocation0] sm:%s67]
    %v70 = vpack.c.bf16 0.0, %v69
    %s71 = sshll.u32 1, %s68
    %s72 = ssub.s32 %s71, 1
    %73 = vst [vmem:[%s1] sm:%s72] %v70

// kernel: tile.10
$region0: #{tile.10}
  #allocation0 [shape = 's32[1]{0}', space=sflag, size = 0x4, scoped, tag = 'scoped memory for tile.10']
  %s0 = inlined_call_operand.vmem [shape: bf16[64], index: 0, kind: input, shape index: {}]
  %s1 = inlined_call_operand.vmem [shape: bf16[6,64], index: 1, kind: output, shape index: {}]
  // Predicated region
  $region2: #{tile.10} parent=0 // pred_check
    _
  $region3: #{tile.10} parent=0 // pred_check_branch
    %3 = sbr.rel (0) target = $region5
  $region4: #{tile.10} parent=0 // pred_region
    _
  $region5: #{tile.10} parent=0 // pred_fallthru
    _
  %v4 = vld [vmem:[%s0] ss:$0 sm:$0xff]
  %v5 = vunpack.i.l.bf16 %v4
  %v7 = vunpack.i.h.bf16 %v4
  %v9 = vpack.c.bf16 0.0, %v5
  %10 = vst [vmem:[%s1] sm:$0xf] %v9

// kernel: mul.11
$region0: #{mul.11}
  %s0 = inlined_call_operand.vmem [shape: f32[6,8,8,8], index: 0, kind: input, shape index: {}]
  %s1 = inlined_call_operand.vmem [shape: f32[48,64], index: 1, kind: output, shape index: {}]
  %v2 = vld [vmem:[%s0] ss:$8 sm:$0xf]
  %v3 = vld [vmem:[%s0] ss:$8 sm:$0xf0]
  %vm4 = vcmask 1047556
  %v5 = vsel %vm4, %v3, %v2
  %vm6 = vcmask 64512
  %7 = vst.msk [vmem:[%s1] sm:$0xff] %vm6, %v5
  %s8 = scalar_lea.vmem %s0, 64
  %v9 = vld [vmem:[%s8] ss:$8 sm:$0xf]
  %s10 = scalar_lea.vmem %s0, 64
  %v11 = vld [vmem:[%s10] ss:$8 sm:$0xf0]
  %vm12 = vcmask 1047556
  %v13 = vsel %vm12, %v11, %v9
  %vm14 = vcmask 64512
  %s15 = scalar_lea.vmem %s1, 8
  %16 = vst.msk [vmem:[%s15] sm:$0xff] %vm14, %v13
  %s17 = scalar_lea.vmem %s0, 128
  %v18 = vld [vmem:[%s17] ss:$8 sm:$0xf]
  %s19 = scalar_lea.vmem %s0, 128
  %v20 = vld [vmem:[%s19] ss:$8 sm:$0xf0]
  %vm21 = vcmask 1047556
  %v22 = vsel %vm21, %v20, %v18
  %vm23 = vcmask 64512
  %s24 = scalar_lea.vmem %s1, 16
  %25 = vst.msk [vmem:[%s24] sm:$0xff] %vm23, %v22
  %s26 = scalar_lea.vmem %s0, 192
  %v27 = vld [vmem:[%s26] ss:$8 sm:$0xf]
  %s28 = scalar_lea.vmem %s0, 192
  %v29 = vld [vmem:[%s28] ss:$8 sm:$0xf0]
  %vm30 = vcmask 1047556
  %v31 = vsel %vm30, %v29, %v27
  %vm32 = vcmask 64512
  %s33 = scalar_lea.vmem %s1, 24
  %34 = vst.msk [vmem:[%s33] sm:$0xff] %vm32, %v31
  %s35 = scalar_lea.vmem %s0, 256
  %v36 = vld [vmem:[%s35] ss:$8 sm:$0xf]
  %s37 = scalar_lea.vmem %s0, 256
  %v38 = vld [vmem:[%s37] ss:$8 sm:$0xf0]
  %vm39 = vcmask 1047556
  %v40 = vsel %vm39, %v38, %v36
  %vm41 = vcmask 64512
  %s42 = scalar_lea.vmem %s1, 32
  %43 = vst.msk [vmem:[%s42] sm:$0xff] %vm41, %v40
  %s44 = scalar_lea.vmem %s0, 320
  %v45 = vld [vmem:[%s44] ss:$8 sm:$0xf]
  %s46 = scalar_lea.vmem %s0, 320
  %v47 = vld [vmem:[%s46] ss:$8 sm:$0xf0]
  %vm48 = vcmask 1047556
  %v49 = vsel %vm48, %v47, %v45
  %vm50 = vcmask 64512
  %s51 = scalar_lea.vmem %s1, 40
  %52 = vst.msk [vmem:[%s51] sm:$0xff] %vm50, %v49
  %s53 = scalar_lea.vmem %s0, 7
  %v54 = vld [vmem:[%s53] ss:$8 sm:$0xf]
  %s55 = scalar_lea.vmem %s0, 7
  %v56 = vld [vmem:[%s55] ss:$8 sm:$0xf0]
  %vm57 = vcmask 1047556
  %v58 = vsel %vm57, %v56, %v54
  %59 = vrot.lane.b32.xlu0 %v58, 56
  %v60 = vpop.permute.xlu0 %59
  %vm61 = vcmask 523712
  %62 = vst.msk [vmem:[%s1] sm:$0xff] %vm61, %v60
  %s63 = scalar_lea.vmem %s0, 263
  %v64 = vld [vmem:[%s63] ss:$8 sm:$0xf]
  %s65 = scalar_lea.vmem %s0, 263
  %v66 = vld [vmem:[%s65] ss:$8 sm:$0xf0]
  %vm67 = vcmask 1047556
  %v68 = vsel %vm67, %v66, %v64
  %69 = vrot.lane.b32.xlu0 %v68, 56
  %v70 = vpop.permute.xlu0 %69
  %vm71 = vcmask 523712
  %s72 = scalar_lea.vmem %s1, 32
  %73 = vst.msk [vmem:[%s72] sm:$0xff] %vm71, %v70
  %s74 = scalar_lea.vmem %s0, 71
  %v75 = vld [vmem:[%s74] ss:$8 sm:$0xf]
  %s76 = scalar_lea.vmem %s0, 71
  %v77 = vld [vmem:[%s76] ss:$8 sm:$0xf0]
  %vm78 = vcmask 1047556
  %v79 = vsel %vm78, %v77, %v75
  %80 = vrot.lane.b32.xlu0 %v79, 56
  %v81 = vpop.permute.xlu0 %80
  %vm82 = vcmask 523712
  %s83 = scalar_lea.vmem %s1, 8
  %84 = vst.msk [vmem:[%s83] sm:$0xff] %vm82, %v81
  %s85 = scalar_lea.vmem %s0, 327
  %v86 = vld [vmem:[%s85] ss:$8 sm:$0xf]
  %s87 = scalar_lea.vmem %s0, 327
  %v88 = vld [vmem:[%s87] ss:$8 sm:$0xf0]
  %vm89 = vcmask 1047556
  %v90 = vsel %vm89, %v88, %v86
  %91 = vrot.lane.b32.xlu0 %v90, 56
  %v92 = vpop.permute.xlu0 %91
  %vm93 = vcmask 523712
  %s94 = scalar_lea.vmem %s1, 40
  %95 = vst.msk [vmem:[%s94] sm:$0xff] %vm93, %v92
  %s96 = scalar_lea.vmem %s0, 135
  %v97 = vld [vmem:[%s96] ss:$8 sm:$0xf]
  %s98 = scalar_lea.vmem %s0, 135
  %v99 = vld [vmem:[%s98] ss:$8 sm:$0xf0]
  %vm100 = vcmask 1047556
  %v101 = vsel %vm100, %v99, %v97
  %102 = vrot.lane.b32.xlu0 %v101, 56
  %v103 = vpop.permute.xlu0 %102
  %vm104 = vcmask 523712
  %s105 = scalar_lea.vmem %s1, 16
  %106 = vst.msk [vmem:[%s105] sm:$0xff] %vm104, %v103
  %s107 = scalar_lea.vmem %s0, 199
  %v108 = vld [vmem:[%s107] ss:$8 sm:$0xf]
  %s109 = scalar_lea.vmem %s0, 199
  %v110 = vld [vmem:[%s109] ss:$8 sm:$0xf0]
  %vm111 = vcmask 1047556
  %v112 = vsel %vm111, %v110, %v108
  %113 = vrot.lane.b32.xlu0 %v112, 56
  %v114 = vpop.permute.xlu0 %113
  %vm115 = vcmask 523712
  %s116 = scalar_lea.vmem %s1, 24
  %117 = vst.msk [vmem:[%s116] sm:$0xff] %vm115, %v114
  %s118 = scalar_lea.vmem %s0, 6
  %v119 = vld [vmem:[%s118] ss:$8 sm:$0xf]
  %s120 = scalar_lea.vmem %s0, 6
  %v121 = vld [vmem:[%s120] ss:$8 sm:$0xf0]
  %vm122 = vcmask 1047556
  %v123 = vsel %vm122, %v121, %v119
  %124 = vrot.lane.b32.xlu0 %v123, 48
  %v125 = vpop.permute.xlu0 %124
  %vm126 = vcmask 458112
  %127 = vst.msk [vmem:[%s1] sm:$0xff] %vm126, %v125
  %s128 = scalar_lea.vmem %s0, 262
  %v129 = vld [vmem:[%s128] ss:$8 sm:$0xf]
  %s130 = scalar_lea.vmem %s0, 262
  %v131 = vld [vmem:[%s130] ss:$8 sm:$0xf0]
  %vm132 = vcmask 1047556
  %v133 = vsel %vm132, %v131, %v129
  %134 = vrot.lane.b32.xlu0 %v133, 48
  %v135 = vpop.permute.xlu0 %134
  %vm136 = vcmask 458112
  %s137 = scalar_lea.vmem %s1, 32
  %138 = vst.msk [vmem:[%s137] sm:$0xff] %vm136, %v135
  %s139 = scalar_lea.vmem %s0, 70
  %v140 = vld [vmem:[%s139] ss:$8 sm:$0xf]
  %s141 = scalar_lea.vmem %s0, 70
  %v142 = vld [vmem:[%s141] ss:$8 sm:$0xf0]
  %vm143 = vcmask 1047556
  %v144 = vsel %vm143, %v142, %v140
  %145 = vrot.lane.b32.xlu0 %v144, 48
  %v146 = vpop.permute.xlu0 %145
  %vm147 = vcmask 458112
  %s148 = scalar_lea.vmem %s1, 8
  %149 = vst.msk [vmem:[%s148] sm:$0xff] %vm147, %v146
  %s150 = scalar_lea.vmem %s0, 326
  %v151 = vld [vmem:[%s150] ss:$8 sm:$0xf]
  %s152 = scalar_lea.vmem %s0, 326
  %v153 = vld [vmem:[%s152] ss:$8 sm:$0xf0]
  %vm154 = vcmask 1047556
  %v155 = vsel %vm154, %v153, %v151
  %156 = vrot.lane.b32.xlu0 %v155, 48
  %v157 = vpop.permute.xlu0 %156
  %vm158 = vcmask 458112
  %s159 = scalar_lea.vmem %s1, 40
  %160 = vst.msk [vmem:[%s159] sm:$0xff] %vm158, %v157
  %s161 = scalar_lea.vmem %s0, 134
  %v162 = vld [vmem:[%s161] ss:$8 sm:$0xf]
  %s163 = scalar_lea.vmem %s0, 134
  %v164 = vld [vmem:[%s163] ss:$8 sm:$0xf0]
  %vm165 = vcmask 1047556
  %v166 = vsel %vm165, %v164, %v162
  %167 = vrot.lane.b32.xlu0 %v166, 48
  %v168 = vpop.permute.xlu0 %167
  %vm169 = vcmask 458112
  %s170 = scalar_lea.vmem %s1, 16
  %171 = vst.msk [vmem:[%s170] sm:$0xff] %vm169, %v168
  %s172 = scalar_lea.vmem %s0, 198
  %v173 = vld [vmem:[%s172] ss:$8 sm:$0xf]
  %s174 = scalar_lea.vmem %s0, 198
  %v175 = vld [vmem:[%s174] ss:$8 sm:$0xf0]
  %vm176 = vcmask 1047556
  %v177 = vsel %vm176, %v175, %v173
  %178 = vrot.lane.b32.xlu0 %v177, 48
  %v179 = vpop.permute.xlu0 %178
  %vm180 = vcmask 458112
  %s181 = scalar_lea.vmem %s1, 24
  %182 = vst.msk [vmem:[%s181] sm:$0xff] %vm180, %v179
  %s183 = scalar_lea.vmem %s0, 5
  %v184 = vld [vmem:[%s183] ss:$8 sm:$0xf]
  %s185 = scalar_lea.vmem %s0, 5
  %v186 = vld [vmem:[%s185] ss:$8 sm:$0xf0]
  %vm187 = vcmask 1047556
  %v188 = vsel %vm187, %v186, %v184
  %189 = vrot.lane.b32.xlu0 %v188, 40
  %v190 = vpop.permute.xlu0 %189
  %vm191 = vcmask 392512
  %192 = vst.msk [vmem:[%s1] sm:$0xff] %vm191, %v190
  %s193 = scalar_lea.vmem %s0, 261
  %v194 = vld [vmem:[%s193] ss:$8 sm:$0xf]
  %s195 = scalar_lea.vmem %s0, 261
  %v196 = vld [vmem:[%s195] ss:$8 sm:$0xf0]
  %vm197 = vcmask 1047556
  %v198 = vsel %vm197, %v196, %v194
  %199 = vrot.lane.b32.xlu0 %v198, 40
  %v200 = vpop.permute.xlu0 %199
  %vm201 = vcmask 392512
  %s202 = scalar_lea.vmem %s1, 32
  %203 = vst.msk [vmem:[%s202] sm:$0xff] %vm201, %v200
  %s204 = scalar_lea.vmem %s0, 69
  %v205 = vld [vmem:[%s204] ss:$8 sm:$0xf]
  %s206 = scalar_lea.vmem %s0, 69
  %v207 = vld [vmem:[%s206] ss:$8 sm:$0xf0]
  %vm208 = vcmask 1047556
  %v209 = vsel %vm208, %v207, %v205
  %210 = vrot.lane.b32.xlu0 %v209, 40
  %v211 = vpop.permute.xlu0 %210
  %vm212 = vcmask 392512
  %s213 = scalar_lea.vmem %s1, 8
  %214 = vst.msk [vmem:[%s213] sm:$0xff] %vm212, %v211
  %s215 = scalar_lea.vmem %s0, 325
  %v216 = vld [vmem:[%s215] ss:$8 sm:$0xf]
  %s217 = scalar_lea.vmem %s0, 325
  %v218 = vld [vmem:[%s217] ss:$8 sm:$0xf0]
  %vm219 = vcmask 1047556
  %v220 = vsel %vm219, %v218, %v216
  %221 = vrot.lane.b32.xlu0 %v220, 40
  %v222 = vpop.permute.xlu0 %221
  %vm223 = vcmask 392512
  %s224 = scalar_lea.vmem %s1, 40
  %225 = vst.msk [vmem:[%s224] sm:$0xff] %vm223, %v222
  %s226 = scalar_lea.vmem %s0, 133
  %v227 = vld [vmem:[%s226] ss:$8 sm:$0xf]
  %s228 = scalar_lea.vmem %s0, 133
  %v229 = vld [vmem:[%s228] ss:$8 sm:$0xf0]
  %vm230 = vcmask 1047556
  %v231 = vsel %vm230, %v229, %v227
  %232 = vrot.lane.b32.xlu0 %v231, 40
  %v233 = vpop.permute.xlu0 %232
  %vm234 = vcmask 392512
  %s235 = scalar_lea.vmem %s1, 16
  %236 = vst.msk [vmem:[%s235] sm:$0xff] %vm234, %v233
  %s237 = scalar_lea.vmem %s0, 197
  %v238 = vld [vmem:[%s237] ss:$8 sm:$0xf]
  %s239 = scalar_lea.vmem %s0, 197
  %v240 = vld [vmem:[%s239] ss:$8 sm:$0xf0]
  %vm241 = vcmask 1047556
  %v242 = vsel %vm241, %v240, %v238
  %243 = vrot.lane.b32.xlu0 %v242, 40
  %v244 = vpop.permute.xlu0 %243
  %vm245 = vcmask 392512
  %s246 = scalar_lea.vmem %s1, 24
  %247 = vst.msk [vmem:[%s246] sm:$0xff] %vm245, %v244
  %s248 = scalar_lea.vmem %s0, 4
  %v249 = vld [vmem:[%s248] ss:$8 sm:$0xf]
  %s250 = scalar_lea.vmem %s0, 4
  %v251 = vld [vmem:[%s250] ss:$8 sm:$0xf0]
  %vm252 = vcmask 1047556
  %v253 = vsel %vm252, %v251, %v249
  %254 = vrot.lane.b32.xlu0 %v253, 32
  %v255 = vpop.permute.xlu0 %254
  %vm256 = vcmask 326912
  %257 = vst.msk [vmem:[%s1] sm:$0xff] %vm256, %v255
  %s258 = scalar_lea.vmem %s0, 260
  %v259 = vld [vmem:[%s258] ss:$8 sm:$0xf]
  %s260 = scalar_lea.vmem %s0, 260
  %v261 = vld [vmem:[%s260] ss:$8 sm:$0xf0]
  %vm262 = vcmask 1047556
  %v263 = vsel %vm262, %v261, %v259
  %264 = vrot.lane.b32.xlu0 %v263, 32
  %v265 = vpop.permute.xlu0 %264
  %vm266 = vcmask 326912
  %s267 = scalar_lea.vmem %s1, 32
  %268 = vst.msk [vmem:[%s267] sm:$0xff] %vm266, %v265
  %s269 = scalar_lea.vmem %s0, 68
  %v270 = vld [vmem:[%s269] ss:$8 sm:$0xf]
  %s271 = scalar_lea.vmem %s0, 68
  %v272 = vld [vmem:[%s271] ss:$8 sm:$0xf0]
  %vm273 = vcmask 1047556
  %v274 = vsel %vm273, %v272, %v270
  %275 = vrot.lane.b32.xlu0 %v274, 32
  %v276 = vpop.permute.xlu0 %275
  %vm277 = vcmask 326912
  %s278 = scalar_lea.vmem %s1, 8
  %279 = vst.msk [vmem:[%s278] sm:$0xff] %vm277, %v276
  %s280 = scalar_lea.vmem %s0, 324
  %v281 = vld [vmem:[%s280] ss:$8 sm:$0xf]
  %s282 = scalar_lea.vmem %s0, 324
  %v283 = vld [vmem:[%s282] ss:$8 sm:$0xf0]
  %vm284 = vcmask 1047556
  %v285 = vsel %vm284, %v283, %v281
  %286 = vrot.lane.b32.xlu0 %v285, 32
  %v287 = vpop.permute.xlu0 %286
  %vm288 = vcmask 326912
  %s289 = scalar_lea.vmem %s1, 40
  %290 = vst.msk [vmem:[%s289] sm:$0xff] %vm288, %v287
  %s291 = scalar_lea.vmem %s0, 132
  %v292 = vld [vmem:[%s291] ss:$8 sm:$0xf]
  %s293 = scalar_lea.vmem %s0, 132
  %v294 = vld [vmem:[%s293] ss:$8 sm:$0xf0]
  %vm295 = vcmask 1047556
  %v296 = vsel %vm295, %v294, %v292
  %297 = vrot.lane.b32.xlu0 %v296, 32
  %v298 = vpop.permute.xlu0 %297
  %vm299 = vcmask 326912
  %s300 = scalar_lea.vmem %s1, 16
  %301 = vst.msk [vmem:[%s300] sm:$0xff] %vm299, %v298
  %s302 = scalar_lea.vmem %s0, 196
  %v303 = vld [vmem:[%s302] ss:$8 sm:$0xf]
  %s304 = scalar_lea.vmem %s0, 196
  %v305 = vld [vmem:[%s304] ss:$8 sm:$0xf0]
  %vm306 = vcmask 1047556
  %v307 = vsel %vm306, %v305, %v303
  %308 = vrot.lane.b32.xlu0 %v307, 32
  %v309 = vpop.permute.xlu0 %308
  %vm310 = vcmask 326912
  %s311 = scalar_lea.vmem %s1, 24
  %312 = vst.msk [vmem:[%s311] sm:$0xff] %vm310, %v309
  %s313 = scalar_lea.vmem %s0, 3
  %v314 = vld [vmem:[%s313] ss:$8 sm:$0xf]
  %s315 = scalar_lea.vmem %s0, 3
  %v316 = vld [vmem:[%s315] ss:$8 sm:$0xf0]
  %vm317 = vcmask 1047556
  %v318 = vsel %vm317, %v316, %v314
  %319 = vrot.lane.b32.xlu0 %v318, 24
  %v320 = vpop.permute.xlu0 %319
  %vm321 = vcmask 261312
  %322 = vst.msk [vmem:[%s1] sm:$0xff] %vm321, %v320
  %s323 = scalar_lea.vmem %s0, 259
  %v324 = vld [vmem:[%s323] ss:$8 sm:$0xf]
  %s325 = scalar_lea.vmem %s0, 259
  %v326 = vld [vmem:[%s325] ss:$8 sm:$0xf0]
  %vm327 = vcmask 1047556
  %v328 = vsel %vm327, %v326, %v324
  %329 = vrot.lane.b32.xlu0 %v328, 24
  %v330 = vpop.permute.xlu0 %329
  %vm331 = vcmask 261312
  %s332 = scalar_lea.vmem %s1, 32
  %333 = vst.msk [vmem:[%s332] sm:$0xff] %vm331, %v330
  %s334 = scalar_lea.vmem %s0, 67
  %v335 = vld [vmem:[%s334] ss:$8 sm:$0xf]
  %s336 = scalar_lea.vmem %s0, 67
  %v337 = vld [vmem:[%s336] ss:$8 sm:$0xf0]
  %vm338 = vcmask 1047556
  %v339 = vsel %vm338, %v337, %v335
  %340 = vrot.lane.b32.xlu0 %v339, 24
  %v341 = vpop.permute.xlu0 %340
  %vm342 = vcmask 261312
  %s343 = scalar_lea.vmem %s1, 8
  %344 = vst.msk [vmem:[%s343] sm:$0xff] %vm342, %v341
  %s345 = scalar_lea.vmem %s0, 323
  %v346 = vld [vmem:[%s345] ss:$8 sm:$0xf]
  %s347 = scalar_lea.vmem %s0, 323
  %v348 = vld [vmem:[%s347] ss:$8 sm:$0xf0]
  %vm349 = vcmask 1047556
  %v350 = vsel %vm349, %v348, %v346
  %351 = vrot.lane.b32.xlu0 %v350, 24
  %v352 = vpop.permute.xlu0 %351
  %vm353 = vcmask 261312
  %s354 = scalar_lea.vmem %s1, 40
  %355 = vst.msk [vmem:[%s354] sm:$0xff] %vm353, %v352
  %s356 = scalar_lea.vmem %s0, 131
  %v357 = vld [vmem:[%s356] ss:$8 sm:$0xf]
  %s358 = scalar_lea.vmem %s0, 131
  %v359 = vld [vmem:[%s358] ss:$8 sm:$0xf0]
  %vm360 = vcmask 1047556
  %v361 = vsel %vm360, %v359, %v357
  %362 = vrot.lane.b32.xlu0 %v361, 24
  %v363 = vpop.permute.xlu0 %362
  %vm364 = vcmask 261312
  %s365 = scalar_lea.vmem %s1, 16
  %366 = vst.msk [vmem:[%s365] sm:$0xff] %vm364, %v363
  %s367 = scalar_lea.vmem %s0, 195
  %v368 = vld [vmem:[%s367] ss:$8 sm:$0xf]
  %s369 = scalar_lea.vmem %s0, 195
  %v370 = vld [vmem:[%s369] ss:$8 sm:$0xf0]
  %vm371 = vcmask 1047556
  %v372 = vsel %vm371, %v370, %v368
  %373 = vrot.lane.b32.xlu0 %v372, 24
  %v374 = vpop.permute.xlu0 %373
  %vm375 = vcmask 261312
  %s376 = scalar_lea.vmem %s1, 24
  %377 = vst.msk [vmem:[%s376] sm:$0xff] %vm375, %v374
  %s378 = scalar_lea.vmem %s0, 2
  %v379 = vld [vmem:[%s378] ss:$8 sm:$0xf]
  %s380 = scalar_lea.vmem %s0, 2
  %v381 = vld [vmem:[%s380] ss:$8 sm:$0xf0]
  %vm382 = vcmask 1047556
  %v383 = vsel %vm382, %v381, %v379
  %384 = vrot.lane.b32.xlu0 %v383, 16
  %v385 = vpop.permute.xlu0 %384
  %vm386 = vcmask 195712
  %387 = vst.msk [vmem:[%s1] sm:$0xff] %vm386, %v385
  %s388 = scalar_lea.vmem %s0, 258
  %v389 = vld [vmem:[%s388] ss:$8 sm:$0xf]
  %s390 = scalar_lea.vmem %s0, 258
  %v391 = vld [vmem:[%s390] ss:$8 sm:$0xf0]
  %vm392 = vcmask 1047556
  %v393 = vsel %vm392, %v391, %v389
  %394 = vrot.lane.b32.xlu0 %v393, 16
  %v395 = vpop.permute.xlu0 %394
  %vm396 = vcmask 195712
  %s397 = scalar_lea.vmem %s1, 32
  %398 = vst.msk [vmem:[%s397] sm:$0xff] %vm396, %v395
  %s399 = scalar_lea.vmem %s0, 66
  %v400 = vld [vmem:[%s399] ss:$8 sm:$0xf]
  %s401 = scalar_lea.vmem %s0, 66
  %v402 = vld [vmem:[%s401] ss:$8 sm:$0xf0]
  %vm403 = vcmask 1047556
  %v404 = vsel %vm403, %v402, %v400
  %405 = vrot.lane.b32.xlu0 %v404, 16
  %v406 = vpop.permute.xlu0 %405
  %vm407 = vcmask 195712
  %s408 = scalar_lea.vmem %s1, 8
  %409 = vst.msk [vmem:[%s408] sm:$0xff] %vm407, %v406
  %s410 = scalar_lea.vmem %s0, 322
  %v411 = vld [vmem:[%s410] ss:$8 sm:$0xf]
  %s412 = scalar_lea.vmem %s0, 322
  %v413 = vld [vmem:[%s412] ss:$8 sm:$0xf0]
  %vm414 = vcmask 1047556
  %v415 = vsel %vm414, %v413, %v411
  %416 = vrot.lane.b32.xlu0 %v415, 16
  %v417 = vpop.permute.xlu0 %416
  %vm418 = vcmask 195712
  %s419 = scalar_lea.vmem %s1, 40
  %420 = vst.msk [vmem:[%s419] sm:$0xff] %vm418, %v417
  %s421 = scalar_lea.vmem %s0, 130
  %v422 = vld [vmem:[%s421] ss:$8 sm:$0xf]
  %s423 = scalar_lea.vmem %s0, 130
  %v424 = vld [vmem:[%s423] ss:$8 sm:$0xf0]
  %vm425 = vcmask 1047556
  %v426 = vsel %vm425, %v424, %v422
  %427 = vrot.lane.b32.xlu0 %v426, 16
  %v428 = vpop.permute.xlu0 %427
  %vm429 = vcmask 195712
  %s430 = scalar_lea.vmem %s1, 16
  %431 = vst.msk [vmem:[%s430] sm:$0xff] %vm429, %v428
  %s432 = scalar_lea.vmem %s0, 194
  %v433 = vld [vmem:[%s432] ss:$8 sm:$0xf]
  %s434 = scalar_lea.vmem %s0, 194
  %v435 = vld [vmem:[%s434] ss:$8 sm:$0xf0]
  %vm436 = vcmask 1047556
  %v437 = vsel %vm436, %v435, %v433
  %438 = vrot.lane.b32.xlu0 %v437, 16
  %v439 = vpop.permute.xlu0 %438
  %vm440 = vcmask 195712
  %s441 = scalar_lea.vmem %s1, 24
  %442 = vst.msk [vmem:[%s441] sm:$0xff] %vm440, %v439
  %s443 = scalar_lea.vmem %s0, 1
  %v444 = vld [vmem:[%s443] ss:$8 sm:$0xf]
  %s445 = scalar_lea.vmem %s0, 1
  %v446 = vld [vmem:[%s445] ss:$8 sm:$0xf0]
  %vm447 = vcmask 1047556
  %v448 = vsel %vm447, %v446, %v444
  %449 = vrot.lane.b32.xlu0 %v448, 8
  %v450 = vpop.permute.xlu0 %449
  %vm451 = vcmask 130112
  %452 = vst.msk [vmem:[%s1] sm:$0xff] %vm451, %v450
  %s453 = scalar_lea.vmem %s0, 257
  %v454 = vld [vmem:[%s453] ss:$8 sm:$0xf]
  %s455 = scalar_lea.vmem %s0, 257
  %v456 = vld [vmem:[%s455] ss:$8 sm:$0xf0]
  %vm457 = vcmask 1047556
  %v458 = vsel %vm457, %v456, %v454
  %459 = vrot.lane.b32.xlu0 %v458, 8
  %v460 = vpop.permute.xlu0 %459
  %vm461 = vcmask 130112
  %s462 = scalar_lea.vmem %s1, 32
  %463 = vst.msk [vmem:[%s462] sm:$0xff] %vm461, %v460
  %s464 = scalar_lea.vmem %s0, 65
  %v465 = vld [vmem:[%s464] ss:$8 sm:$0xf]
  %s466 = scalar_lea.vmem %s0, 65
  %v467 = vld [vmem:[%s466] ss:$8 sm:$0xf0]
  %vm468 = vcmask 1047556
  %v469 = vsel %vm468, %v467, %v465
  %470 = vrot.lane.b32.xlu0 %v469, 8
  %v471 = vpop.permute.xlu0 %470
  %vm472 = vcmask 130112
  %s473 = scalar_lea.vmem %s1, 8
  %474 = vst.msk [vmem:[%s473] sm:$0xff] %vm472, %v471
  %s475 = scalar_lea.vmem %s0, 321
  %v476 = vld [vmem:[%s475] ss:$8 sm:$0xf]
  %s477 = scalar_lea.vmem %s0, 321
  %v478 = vld [vmem:[%s477] ss:$8 sm:$0xf0]
  %vm479 = vcmask 1047556
  %v480 = vsel %vm479, %v478, %v476
  %481 = vrot.lane.b32.xlu0 %v480, 8
  %v482 = vpop.permute.xlu0 %481
  %vm483 = vcmask 130112
  %s484 = scalar_lea.vmem %s1, 40
  %485 = vst.msk [vmem:[%s484] sm:$0xff] %vm483, %v482
  %s486 = scalar_lea.vmem %s0, 129
  %v487 = vld [vmem:[%s486] ss:$8 sm:$0xf]
  %s488 = scalar_lea.vmem %s0, 129
  %v489 = vld [vmem:[%s488] ss:$8 sm:$0xf0]
  %vm490 = vcmask 1047556
  %v491 = vsel %vm490, %v489, %v487
  %492 = vrot.lane.b32.xlu0 %v491, 8
  %v493 = vpop.permute.xlu0 %492
  %vm494 = vcmask 130112
  %s495 = scalar_lea.vmem %s1, 16
  %496 = vst.msk [vmem:[%s495] sm:$0xff] %vm494, %v493
  %s497 = scalar_lea.vmem %s0, 193
  %v498 = vld [vmem:[%s497] ss:$8 sm:$0xf]
  %s499 = scalar_lea.vmem %s0, 193
  %v500 = vld [vmem:[%s499] ss:$8 sm:$0xf0]
  %vm501 = vcmask 1047556
  %v502 = vsel %vm501, %v500, %v498
  %503 = vrot.lane.b32.xlu0 %v502, 8
  %v504 = vpop.permute.xlu0 %503
  %vm505 = vcmask 130112
  %s506 = scalar_lea.vmem %s1, 24
  %507 = vst.msk [vmem:[%s506] sm:$0xff] %vm505, %v504

// kernel: tile.13
$region0: #{tile.13}
  %s0 = inlined_call_operand.vmem [shape: bf16[6,8], index: 0, kind: input, shape index: {}]
  %s1 = inlined_call_operand.vmem [shape: bf16[48], index: 1, kind: output, shape index: {}]
  $region1: #{tile.13} parent=0
    #allocation0 [shape = 'u8[4096]{0}', space=vmem, size = 0x1000, scoped, tag = 'scoped mem for output reshape']
    #allocation1 [shape = 'u8[4096]{0}', space=vmem, size = 0x1000, scoped, tag = 'scoped mem for input reshape']
    %s3 = smul.u32 4, 2
    %s4 = sshll.u32 1, %s3
    %s5 = ssub.s32 %s4, 1
    %s6 = sshrl.u32 %s5, 1
    %s7 = sor.u32 %s5, %s6
    %s8 = sand.u32 %s7, 85
    %s9 = sshrl.u32 %s8, 1
    %s10 = sor.u32 %s8, %s9
    %s11 = sand.u32 51, %s10
    %s12 = sshrl.u32 %s11, 2
    %s13 = sor.u32 %s11, %s12
    %s14 = sand.u32 15, %s13
    %v15 = vld [vmem:[%s0] sm:%s14]
    %v16 = vunpack.c.l.bf16 %v15
    %v17 = vunpack.c.h.bf16 %v15
    %18 = vst [vmem:[#allocation1] sm:%s5] %v16
    %v19 = vld [vmem:[#allocation1] sm:$0x1]
    %vm20 = vcmask 64512
    %21 = vst.msk [vmem:[#allocation0] sm:$0x1] %vm20, %v19
    %s22 = scalar_lea.vmem [#allocation1], 5
    %v23 = vld [vmem:[%s22] sm:$0x1]
    %24 = vrot.lane.b32.xlu0 %v23, 40
    %v25 = vpop.permute.xlu0 %24
    %vm26 = vcmask 392512
    %27 = vst.msk [vmem:[#allocation0] sm:$0x1] %vm26, %v25
    %s28 = scalar_lea.vmem [#allocation1], 4
    %v29 = vld [vmem:[%s28] sm:$0x1]
    %30 = vrot.lane.b32.xlu0 %v29, 32
    %v31 = vpop.permute.xlu0 %30
    %vm32 = vcmask 326912
    %33 = vst.msk [vmem:[#allocation0] sm:$0x1] %vm32, %v31
    %s34 = scalar_lea.vmem [#allocation1], 3
    %v35 = vld [vmem:[%s34] sm:$0x1]
    %36 = vrot.lane.b32.xlu0 %v35, 24
    %v37 = vpop.permute.xlu0 %36
    %vm38 = vcmask 261312
    %39 = vst.msk [vmem:[#allocation0] sm:$0x1] %vm38, %v37
    %s40 = scalar_lea.vmem [#allocation1], 2
    %v41 = vld [vmem:[%s40] sm:$0x1]
    %42 = vrot.lane.b32.xlu0 %v41, 16
    %v43 = vpop.permute.xlu0 %42
    %vm44 = vcmask 195712
    %45 = vst.msk [vmem:[#allocation0] sm:$0x1] %vm44, %v43
    %s46 = scalar_lea.vmem [#allocation1], 1
    %v47 = vld [vmem:[%s46] sm:$0x1]
    %48 = vrot.lane.b32.xlu0 %v47, 8
    %v49 = vpop.permute.xlu0 %48
    %vm50 = vcmask 130112
    %51 = vst.msk [vmem:[#allocation0] sm:$0x1] %vm50, %v49
    %s53 = smul.u32 1, 2
    %s54 = sshll.u32 1, %s53
    %s55 = ssub.s32 %s54, 1
    %s56 = sshrl.u32 %s53, 1
    %v57 = vld [vmem:[#allocation0] sm:%s55]
    %v58 = vpack.c.bf16 0.0, %v57
    %s59 = sshll.u32 1, %s56
    %s60 = ssub.s32 %s59, 1
    %61 = vst [vmem:[%s1] sm:%s60] %v58

// kernel: tile.14
$region0: #{tile.14}
  #allocation0 [shape = 's32[1]{0}', space=sflag, size = 0x4, scoped, tag = 'scoped memory for tile.14']
  %s0 = inlined_call_operand.vmem [shape: bf16[48], index: 0, kind: input, shape index: {}]
  %s1 = inlined_call_operand.vmem [shape: bf16[6,48], index: 1, kind: output, shape index: {}]
  // Predicated region
  $region2: #{tile.14} parent=0 // pred_check
    _
  $region3: #{tile.14} parent=0 // pred_check_branch
    %3 = sbr.rel (0) target = $region5
  $region4: #{tile.14} parent=0 // pred_region
    _
  $region5: #{tile.14} parent=0 // pred_fallthru
    _
  %v4 = vld [vmem:[%s0] ss:$0 sm:$0xff]
  %v5 = vunpack.i.l.bf16 %v4
  %v7 = vunpack.i.h.bf16 %v4
  %v9 = vpack.c.bf16 0.0, %v5
  %10 = vst [vmem:[%s1] sm:$0xf] %v9

</llo_original>
